<compile_context>
chip_gen: v7x
topology: tpu7x:2x2x1
jax: 0.10.0
libtpu: 0.0.40
codegen_flags: <defaults>
</compile_context>

<pallas_src>
import functools

import jax
import jax.numpy as jnp
from jax.experimental import pallas as pl
from jax.experimental.pallas import tpu as pltpu


def _bn_prelu(h, gamma, beta, slope, eps=1e-5):
    """BatchNorm1d (training mode: batch mean / biased batch var) followed by PReLU."""
    mean = jnp.mean(h, axis=0, keepdims=True)
    d = h - mean
    var = jnp.mean(d * d, axis=0, keepdims=True)
    scale = gamma * jax.lax.rsqrt(var + eps)          # fold gamma into the rsqrt scale
    hn = d * scale + beta
    return jnp.where(hn >= 0.0, hn, slope * hn)


def cde_kernel(
    x_ref,        # [B, d]                 VMEM
    w1t_ref,      # [d, n_params]          VMEM
    w2t_ref,      # [n_params, n_params]   VMEM
    w3t_ref,      # [n_params, n_params]   VMEM
    bn_ref,       # [8, n_params]          VMEM  rows: g1,b1,g2,b2,g3,b3,0,0
    slope_ref,    # [4]                    SMEM  PReLU slopes a1,a2,a3,0
    wh_ref,       # [2*n_params, P]        VMEM  fused pi|mu|sg head weights
    bh_ref,       # [1, P]                 VMEM  fused head bias
    out_ref,      # [B, P]                 VMEM  packed pi|mu|sg (+pad) output
    *,
    n_params,
    n_components,
):
    x = x_ref[...]
    a1 = slope_ref[0]
    a2 = slope_ref[1]
    a3 = slope_ref[2]

    # --- fc_in: 3x (Linear(bias=False) -> BatchNorm1d -> PReLU) ---
    h = jnp.dot(x, w1t_ref[...], preferred_element_type=jnp.float32)
    z = _bn_prelu(h, bn_ref[0:1, :], bn_ref[1:2, :], a1)

    h = jnp.dot(z, w2t_ref[...], preferred_element_type=jnp.float32)
    z = _bn_prelu(h, bn_ref[2:3, :], bn_ref[3:4, :], a2)

    h = jnp.dot(z, w3t_ref[...], preferred_element_type=jnp.float32)
    z = _bn_prelu(h, bn_ref[4:5, :], bn_ref[5:6, :], a3)

    # --- fused heads (lane-dense): columns [0:K)=pi logits, [K:2K)=mu, [2K:3K)=sigma ---
    # pi uses clamp(z, -1000, 1000); mu/sigma use raw z, so the contraction is split over
    # the two row-blocks of the single fused weight array.
    zc = jnp.clip(z, -1000.0, 1000.0)
    heads = (
        jnp.dot(zc, wh_ref[0:n_params, :], preferred_element_type=jnp.float32)
        + jnp.dot(z, wh_ref[n_params:2 * n_params, :], preferred_element_type=jnp.float32)
        + bh_ref[...]
    )

    K = n_components
    lane = jax.lax.broadcasted_iota(jnp.int32, heads.shape, 1)
    pi_mask = lane < K
    pimu_mask = lane < 2 * K

    # pi: masked softmax over the first K lanes
    logits = jnp.where(pi_mask, heads, -1e30)
    m = jnp.max(logits, axis=-1, keepdims=True)
    e = jnp.exp(logits - m)                      # masked lanes -> 0
    pi_vals = e * pl.reciprocal(jnp.sum(e, axis=-1, keepdims=True))   # exact reciprocal

    # mu: clamp(Linear(z), -30, 30)
    mu_vals = jnp.clip(heads, -30.0, 30.0)

    # sigma: clamp(softplus(Linear(z)), 0.01, 100)   (torch softplus, threshold=20)
    sp = jnp.where(heads > 20.0, heads, jnp.log1p(jnp.exp(jnp.minimum(heads, 20.0))))
    sg_vals = jnp.clip(sp, 0.01, 100.0)

    out_ref[...] = jnp.where(pi_mask, pi_vals, jnp.where(pimu_mask, mu_vals, sg_vals))


def make_cde_params(key, d, n_params, n_components, dtype=jnp.float32):
    """Deterministic synthetic parameters mirroring CDE.__init__ (init_type='default')."""
    ks = jax.random.split(key, 8)
    p = {}
    p["w1"] = jax.random.normal(ks[0], (n_params, d), dtype) * 0.2
    p["w2"] = jax.random.normal(ks[1], (n_params, n_params), dtype) * 0.2
    p["w3"] = jax.random.normal(ks[2], (n_params, n_params), dtype) * 0.2
    for i in (1, 2, 3):
        p[f"g{i}"] = jnp.ones((n_params,), dtype)      # BN gamma
        p[f"b{i}"] = jnp.zeros((n_params,), dtype)     # BN beta
        p[f"a{i}"] = jnp.asarray(0.25, dtype)          # PReLU default slope
    # pi head: default nn.Linear init (any deterministic values)
    p["wpi"] = jax.random.normal(ks[3], (n_components, n_params), dtype) * 0.1
    p["bpi"] = jax.random.normal(ks[4], (n_components,), dtype) * 0.1
    # mu head: weight = 0, bias = linspace(-3, 3, K)  (explicit in CDE.__init__)
    p["wmu"] = jnp.zeros((n_components, n_params), dtype)
    p["bmu"] = jnp.linspace(-3.0, 3.0, n_components, dtype=dtype)
    # sigma head
    p["wsg"] = jax.random.normal(ks[5], (n_components, n_params), dtype) * 0.1
    p["bsg"] = jax.random.normal(ks[6], (n_components,), dtype) * 0.1
    return p


def pack_cde_params(params, n_components):
    """One-time packing (outside the jitted forward): transposed trunk weights, one BN slab,
    one SMEM slope vector, and a single fused lane-dense head weight/bias."""
    f32 = jnp.float32
    K = n_components
    n_params = params["w1"].shape[0]
    P = ((3 * K + 127) // 128) * 128   # pad 3K up to a multiple of 128 lanes

    wh = jnp.zeros((2 * n_params, P), f32)
    wh = wh.at[:n_params, 0:K].set(params["wpi"].T.astype(f32))          # pi block (fed zc)
    wh = wh.at[n_params:, K:2 * K].set(params["wmu"].T.astype(f32))      # mu block (fed z)
    wh = wh.at[n_params:, 2 * K:3 * K].set(params["wsg"].T.astype(f32))  # sg block (fed z)

    bh = jnp.zeros((1, P), f32)
    bh = bh.at[0, 0:K].set(params["bpi"].astype(f32))
    bh = bh.at[0, K:2 * K].set(params["bmu"].astype(f32))
    bh = bh.at[0, 2 * K:3 * K].set(params["bsg"].astype(f32))

    zero_row = jnp.zeros((n_params,), f32)
    bn = jnp.stack(
        [params["g1"], params["b1"],
         params["g2"], params["b2"],
         params["g3"], params["b3"],
         zero_row, zero_row],
        axis=0,
    ).astype(f32)

    slopes = jnp.stack(
        [params["a1"], params["a2"], params["a3"], jnp.asarray(0.0, f32)]
    ).astype(f32)

    return {
        "w1t": params["w1"].T.astype(f32),   # [d, n_params]
        "w2t": params["w2"].T.astype(f32),   # [n_params, n_params]
        "w3t": params["w3"].T.astype(f32),   # [n_params, n_params]
        "bn": bn,                            # [8, n_params]
        "slopes": slopes,                    # [4]  (SMEM)
        "w_heads": wh,                       # [2*n_params, P]
        "b_heads": bh,                       # [1, P]
    }


@functools.partial(jax.jit, static_argnames=("n_components",))
def cde_forward(x, packed, *, n_components):
    B = x.shape[0]
    K = n_components
    n_params = packed["w1t"].shape[-1]
    P = packed["w_heads"].shape[-1]

    vmem = pl.BlockSpec(memory_space=pltpu.MemorySpace.VMEM)
    smem = pl.BlockSpec(memory_space=pltpu.MemorySpace.SMEM)

    out = pl.pallas_call(
        functools.partial(cde_kernel, n_params=n_params, n_components=K),
        out_shape=jax.ShapeDtypeStruct((B, P), jnp.float32),
        in_specs=[vmem, vmem, vmem, vmem, vmem, smem, vmem, vmem],
        out_specs=vmem,
    )(
        x.astype(jnp.float32),
        packed["w1t"], packed["w2t"], packed["w3t"],
        packed["bn"], packed["slopes"],
        packed["w_heads"], packed["b_heads"],
    )

    pi = out[:, 0:K]
    mu = out[:, K:2 * K]
    sg = out[:, 2 * K:3 * K]
    return pi, mu, sg


def cde_reference(x, params):
    """Pure-JAX reference of the PyTorch forward (training-mode BN)."""
    def bn_prelu(h, g, b, a):
        mean = jnp.mean(h, axis=0, keepdims=True)
        var = jnp.mean((h - mean) ** 2, axis=0, keepdims=True)
        hn = (h - mean) / jnp.sqrt(var + 1e-5) * g + b
        return jnp.where(hn >= 0.0, hn, a * hn)

    z = bn_prelu(x @ params["w1"].T, params["g1"], params["b1"], params["a1"])
    z = bn_prelu(z @ params["w2"].T, params["g2"], params["b2"], params["a2"])
    z = bn_prelu(z @ params["w3"].T, params["g3"], params["b3"], params["a3"])
    zc = jnp.clip(z, -1000.0, 1000.0)
    pi = jax.nn.softmax(zc @ params["wpi"].T + params["bpi"], axis=-1)
    mu = jnp.clip(z @ params["wmu"].T + params["bmu"], -30.0, 30.0)
    s = z @ params["wsg"].T + params["bsg"]
    sp = jnp.where(s > 20.0, s, jnp.log1p(jnp.exp(jnp.minimum(s, 20.0))))
    sg = jnp.clip(sp, 0.01, 100.0)
    return pi, mu, sg


if __name__ == "__main__":
    B, d, n_params, n_components = 8, 4, 32, 5

    key = jax.random.PRNGKey(0)
    kx, kp = jax.random.split(key)
    x = jax.random.normal(kx, (B, d), jnp.float32)   # x is assumed already standardized
    params = make_cde_params(kp, d, n_params, n_components)
    packed = pack_cde_params(params, n_components)   # one-time packing, outside the jit

    pi, mu, sigma = cde_forward(x, packed, n_components=n_components)
    jax.block_until_ready((pi, mu, sigma))

    # shape / structural sanity
    assert pi.shape == (B, n_components)
    assert mu.shape == (B, n_components)
    assert sigma.shape == (B, n_components)
    assert bool(jnp.allclose(jnp.sum(pi, axis=-1), 1.0, atol=1e-5))
    assert bool(jnp.all((sigma >= 0.01) & (sigma <= 100.0)))
    # mu head has zero weight -> output must equal the linspace bias exactly
    assert bool(jnp.allclose(mu, jnp.broadcast_to(params["bmu"], (B, n_components)), atol=1e-6))

    # compare against the pure-JAX reference (loose tolerance: MXU f32 matmuls may use a
    # different bf16-pass decomposition than XLA's default-precision dot)
    pi_r, mu_r, sg_r = cde_reference(x, params)
    assert bool(jnp.allclose(pi, pi_r, atol=2e-2, rtol=2e-2))
    assert bool(jnp.allclose(mu, mu_r, atol=2e-2, rtol=2e-2))
    assert bool(jnp.allclose(sigma, sg_r, atol=2e-2, rtol=2e-2))

    # TODO(synk): training-mode BatchNorm running-stat updates (a side effect, not a forward
    # output) are not modeled.
    print("KERNEL_OK")
</pallas_src>

<mosaic_0001>
module attributes {stable_mosaic.version = 11 : i64} {
  func.func @cde_kernel(%arg0: memref<8x4xf32, #tpu.memory_space<vmem>>, %arg1: memref<4x32xf32, #tpu.memory_space<vmem>>, %arg2: memref<32x32xf32, #tpu.memory_space<vmem>>, %arg3: memref<32x32xf32, #tpu.memory_space<vmem>>, %arg4: memref<8x32xf32, #tpu.memory_space<vmem>>, %arg5: memref<4xf32, #tpu.memory_space<smem>>, %arg6: memref<64x128xf32, #tpu.memory_space<vmem>>, %arg7: memref<1x128xf32, #tpu.memory_space<vmem>>, %arg8: memref<8x128xf32, #tpu.memory_space<vmem>>) attributes {dimension_semantics = [], scalar_prefetch = 0 : i64, scratch_operands = 0 : i64, tpu.core_type = #tpu.core_type<tc>} {
    %c0 = arith.constant 0 : index
    %c0_0 = arith.constant 0 : index
    %0 = vector.load %arg0[%c0, %c0_0] : memref<8x4xf32, #tpu.memory_space<vmem>>, vector<8x4xf32>
    %c0_1 = arith.constant 0 : index
    %1 = memref.load %arg5[%c0_1] : memref<4xf32, #tpu.memory_space<smem>>
    %c1 = arith.constant 1 : index
    %2 = memref.load %arg5[%c1] : memref<4xf32, #tpu.memory_space<smem>>
    %c2 = arith.constant 2 : index
    %3 = memref.load %arg5[%c2] : memref<4xf32, #tpu.memory_space<smem>>
    %c0_2 = arith.constant 0 : index
    %c0_3 = arith.constant 0 : index
    %4 = vector.load %arg1[%c0_2, %c0_3] : memref<4x32xf32, #tpu.memory_space<vmem>>, vector<4x32xf32>
    %cst = arith.constant dense<0.000000e+00> : vector<8x32xf32>
    %5 = tpu.matmul %0, %4, %cst {dimension_numbers = #tpu.dot_dimension_numbers<[1], [0], [0], [1], [0, 0, 1, 1], [], []>} : vector<8x4xf32>, vector<4x32xf32>, vector<8x32xf32> -> vector<8x32xf32>
    %c0_4 = arith.constant 0 : index
    %c0_5 = arith.constant 0 : index
    %6 = vector.load %arg4[%c0_4, %c0_5] : memref<8x32xf32, #tpu.memory_space<vmem>>, vector<1x32xf32>
    %c1_6 = arith.constant 1 : index
    %c0_7 = arith.constant 0 : index
    %7 = vector.load %arg4[%c1_6, %c0_7] : memref<8x32xf32, #tpu.memory_space<vmem>>, vector<1x32xf32>
    %cst_8 = arith.constant dense<0.000000e+00> : vector<32xf32>
    %8 = vector.multi_reduction <add>, %5, %cst_8 [0] : vector<8x32xf32> to vector<32xf32>
    %9 = vector.shape_cast %8 : vector<32xf32> to vector<1x32xf32>
    %cst_9 = arith.constant 8.000000e+00 : f32
    %10 = vector.broadcast %cst_9 : f32 to vector<1x32xf32>
    %11 = arith.divf %9, %10 : vector<1x32xf32>
    %12 = vector.broadcast %11 : vector<1x32xf32> to vector<8x32xf32>
    %13 = arith.subf %5, %12 : vector<8x32xf32>
    %14 = arith.mulf %13, %13 : vector<8x32xf32>
    %cst_10 = arith.constant dense<0.000000e+00> : vector<32xf32>
    %15 = vector.multi_reduction <add>, %14, %cst_10 [0] : vector<8x32xf32> to vector<32xf32>
    %16 = vector.shape_cast %15 : vector<32xf32> to vector<1x32xf32>
    %cst_11 = arith.constant 8.000000e+00 : f32
    %17 = vector.broadcast %cst_11 : f32 to vector<1x32xf32>
    %18 = arith.divf %16, %17 : vector<1x32xf32>
    %cst_12 = arith.constant 9.99999974E-6 : f32
    %19 = vector.broadcast %cst_12 : f32 to vector<1x32xf32>
    %20 = arith.addf %18, %19 : vector<1x32xf32>
    %21 = math.rsqrt %20 : vector<1x32xf32>
    %22 = arith.mulf %6, %21 : vector<1x32xf32>
    %23 = vector.broadcast %22 : vector<1x32xf32> to vector<8x32xf32>
    %24 = arith.mulf %13, %23 : vector<8x32xf32>
    %25 = vector.broadcast %7 : vector<1x32xf32> to vector<8x32xf32>
    %26 = arith.addf %24, %25 : vector<8x32xf32>
    %cst_13 = arith.constant 0.000000e+00 : f32
    %27 = vector.broadcast %cst_13 : f32 to vector<8x32xf32>
    %28 = arith.cmpf oge, %26, %27 : vector<8x32xf32>
    %29 = vector.broadcast %1 : f32 to vector<8x32xf32>
    %30 = arith.mulf %29, %26 : vector<8x32xf32>
    %31 = arith.select %28, %26, %30 : vector<8x32xi1>, vector<8x32xf32>
    %c0_14 = arith.constant 0 : index
    %c0_15 = arith.constant 0 : index
    %32 = vector.load %arg2[%c0_14, %c0_15] : memref<32x32xf32, #tpu.memory_space<vmem>>, vector<32x32xf32>
    %cst_16 = arith.constant dense<0.000000e+00> : vector<8x32xf32>
    %33 = tpu.matmul %31, %32, %cst_16 {dimension_numbers = #tpu.dot_dimension_numbers<[1], [0], [0], [1], [0, 0, 1, 1], [], []>} : vector<8x32xf32>, vector<32x32xf32>, vector<8x32xf32> -> vector<8x32xf32>
    %c2_17 = arith.constant 2 : index
    %c0_18 = arith.constant 0 : index
    %34 = vector.load %arg4[%c2_17, %c0_18] : memref<8x32xf32, #tpu.memory_space<vmem>>, vector<1x32xf32>
    %c3 = arith.constant 3 : index
    %c0_19 = arith.constant 0 : index
    %35 = vector.load %arg4[%c3, %c0_19] : memref<8x32xf32, #tpu.memory_space<vmem>>, vector<1x32xf32>
    %cst_20 = arith.constant dense<0.000000e+00> : vector<32xf32>
    %36 = vector.multi_reduction <add>, %33, %cst_20 [0] : vector<8x32xf32> to vector<32xf32>
    %37 = vector.shape_cast %36 : vector<32xf32> to vector<1x32xf32>
    %cst_21 = arith.constant 8.000000e+00 : f32
    %38 = vector.broadcast %cst_21 : f32 to vector<1x32xf32>
    %39 = arith.divf %37, %38 : vector<1x32xf32>
    %40 = vector.broadcast %39 : vector<1x32xf32> to vector<8x32xf32>
    %41 = arith.subf %33, %40 : vector<8x32xf32>
    %42 = arith.mulf %41, %41 : vector<8x32xf32>
    %cst_22 = arith.constant dense<0.000000e+00> : vector<32xf32>
    %43 = vector.multi_reduction <add>, %42, %cst_22 [0] : vector<8x32xf32> to vector<32xf32>
    %44 = vector.shape_cast %43 : vector<32xf32> to vector<1x32xf32>
    %cst_23 = arith.constant 8.000000e+00 : f32
    %45 = vector.broadcast %cst_23 : f32 to vector<1x32xf32>
    %46 = arith.divf %44, %45 : vector<1x32xf32>
    %cst_24 = arith.constant 9.99999974E-6 : f32
    %47 = vector.broadcast %cst_24 : f32 to vector<1x32xf32>
    %48 = arith.addf %46, %47 : vector<1x32xf32>
    %49 = math.rsqrt %48 : vector<1x32xf32>
    %50 = arith.mulf %34, %49 : vector<1x32xf32>
    %51 = vector.broadcast %50 : vector<1x32xf32> to vector<8x32xf32>
    %52 = arith.mulf %41, %51 : vector<8x32xf32>
    %53 = vector.broadcast %35 : vector<1x32xf32> to vector<8x32xf32>
    %54 = arith.addf %52, %53 : vector<8x32xf32>
    %cst_25 = arith.constant 0.000000e+00 : f32
    %55 = vector.broadcast %cst_25 : f32 to vector<8x32xf32>
    %56 = arith.cmpf oge, %54, %55 : vector<8x32xf32>
    %57 = vector.broadcast %2 : f32 to vector<8x32xf32>
    %58 = arith.mulf %57, %54 : vector<8x32xf32>
    %59 = arith.select %56, %54, %58 : vector<8x32xi1>, vector<8x32xf32>
    %c0_26 = arith.constant 0 : index
    %c0_27 = arith.constant 0 : index
    %60 = vector.load %arg3[%c0_26, %c0_27] : memref<32x32xf32, #tpu.memory_space<vmem>>, vector<32x32xf32>
    %cst_28 = arith.constant dense<0.000000e+00> : vector<8x32xf32>
    %61 = tpu.matmul %59, %60, %cst_28 {dimension_numbers = #tpu.dot_dimension_numbers<[1], [0], [0], [1], [0, 0, 1, 1], [], []>} : vector<8x32xf32>, vector<32x32xf32>, vector<8x32xf32> -> vector<8x32xf32>
    %c4 = arith.constant 4 : index
    %c0_29 = arith.constant 0 : index
    %62 = vector.load %arg4[%c4, %c0_29] : memref<8x32xf32, #tpu.memory_space<vmem>>, vector<1x32xf32>
    %c5 = arith.constant 5 : index
    %c0_30 = arith.constant 0 : index
    %63 = vector.load %arg4[%c5, %c0_30] : memref<8x32xf32, #tpu.memory_space<vmem>>, vector<1x32xf32>
    %cst_31 = arith.constant dense<0.000000e+00> : vector<32xf32>
    %64 = vector.multi_reduction <add>, %61, %cst_31 [0] : vector<8x32xf32> to vector<32xf32>
    %65 = vector.shape_cast %64 : vector<32xf32> to vector<1x32xf32>
    %cst_32 = arith.constant 8.000000e+00 : f32
    %66 = vector.broadcast %cst_32 : f32 to vector<1x32xf32>
    %67 = arith.divf %65, %66 : vector<1x32xf32>
    %68 = vector.broadcast %67 : vector<1x32xf32> to vector<8x32xf32>
    %69 = arith.subf %61, %68 : vector<8x32xf32>
    %70 = arith.mulf %69, %69 : vector<8x32xf32>
    %cst_33 = arith.constant dense<0.000000e+00> : vector<32xf32>
    %71 = vector.multi_reduction <add>, %70, %cst_33 [0] : vector<8x32xf32> to vector<32xf32>
    %72 = vector.shape_cast %71 : vector<32xf32> to vector<1x32xf32>
    %cst_34 = arith.constant 8.000000e+00 : f32
    %73 = vector.broadcast %cst_34 : f32 to vector<1x32xf32>
    %74 = arith.divf %72, %73 : vector<1x32xf32>
    %cst_35 = arith.constant 9.99999974E-6 : f32
    %75 = vector.broadcast %cst_35 : f32 to vector<1x32xf32>
    %76 = arith.addf %74, %75 : vector<1x32xf32>
    %77 = math.rsqrt %76 : vector<1x32xf32>
    %78 = arith.mulf %62, %77 : vector<1x32xf32>
    %79 = vector.broadcast %78 : vector<1x32xf32> to vector<8x32xf32>
    %80 = arith.mulf %69, %79 : vector<8x32xf32>
    %81 = vector.broadcast %63 : vector<1x32xf32> to vector<8x32xf32>
    %82 = arith.addf %80, %81 : vector<8x32xf32>
    %cst_36 = arith.constant 0.000000e+00 : f32
    %83 = vector.broadcast %cst_36 : f32 to vector<8x32xf32>
    %84 = arith.cmpf oge, %82, %83 : vector<8x32xf32>
    %85 = vector.broadcast %3 : f32 to vector<8x32xf32>
    %86 = arith.mulf %85, %82 : vector<8x32xf32>
    %87 = arith.select %84, %82, %86 : vector<8x32xi1>, vector<8x32xf32>
    %cst_37 = arith.constant -1.000000e+03 : f32
    %cst_38 = arith.constant 1.000000e+03 : f32
    %88 = vector.broadcast %cst_37 : f32 to vector<8x32xf32>
    %89 = arith.maximumf %88, %87 : vector<8x32xf32>
    %90 = vector.broadcast %cst_38 : f32 to vector<8x32xf32>
    %91 = arith.minimumf %90, %89 : vector<8x32xf32>
    %c0_39 = arith.constant 0 : index
    %c0_40 = arith.constant 0 : index
    %92 = vector.load %arg6[%c0_39, %c0_40] : memref<64x128xf32, #tpu.memory_space<vmem>>, vector<32x128xf32>
    %cst_41 = arith.constant dense<0.000000e+00> : vector<8x128xf32>
    %93 = tpu.matmul %91, %92, %cst_41 {dimension_numbers = #tpu.dot_dimension_numbers<[1], [0], [0], [1], [0, 0, 1, 1], [], []>} : vector<8x32xf32>, vector<32x128xf32>, vector<8x128xf32> -> vector<8x128xf32>
    %c32 = arith.constant 32 : index
    %c0_42 = arith.constant 0 : index
    %94 = vector.load %arg6[%c32, %c0_42] : memref<64x128xf32, #tpu.memory_space<vmem>>, vector<32x128xf32>
    %cst_43 = arith.constant dense<0.000000e+00> : vector<8x128xf32>
    %95 = tpu.matmul %87, %94, %cst_43 {dimension_numbers = #tpu.dot_dimension_numbers<[1], [0], [0], [1], [0, 0, 1, 1], [], []>} : vector<8x32xf32>, vector<32x128xf32>, vector<8x128xf32> -> vector<8x128xf32>
    %96 = arith.addf %93, %95 : vector<8x128xf32>
    %c0_44 = arith.constant 0 : index
    %c0_45 = arith.constant 0 : index
    %97 = vector.load %arg7[%c0_44, %c0_45] : memref<1x128xf32, #tpu.memory_space<vmem>>, vector<1x128xf32>
    %98 = vector.broadcast %97 : vector<1x128xf32> to vector<8x128xf32>
    %99 = arith.addf %96, %98 : vector<8x128xf32>
    %100 = tpu.iota {dimensions = array<i32: 1>} : vector<8x128xi32>
    %c5_i32 = arith.constant 5 : i32
    %101 = vector.broadcast %c5_i32 : i32 to vector<8x128xi32>
    %102 = arith.cmpi slt, %100, %101 : vector<8x128xi32>
    %c10_i32 = arith.constant 10 : i32
    %103 = vector.broadcast %c10_i32 : i32 to vector<8x128xi32>
    %104 = arith.cmpi slt, %100, %103 : vector<8x128xi32>
    %cst_46 = arith.constant -1.000000e+30 : f32
    %105 = vector.broadcast %cst_46 : f32 to vector<8x128xf32>
    %106 = arith.select %102, %99, %105 : vector<8x128xi1>, vector<8x128xf32>
    %cst_47 = arith.constant dense<0xFF800000> : vector<8xf32>
    %107 = vector.multi_reduction <maximumf>, %106, %cst_47 [1] : vector<8x128xf32> to vector<8xf32>
    %108 = vector.shape_cast %107 : vector<8xf32> to vector<8x1xf32>
    %109 = vector.broadcast %108 : vector<8x1xf32> to vector<8x128xf32>
    %110 = arith.subf %106, %109 : vector<8x128xf32>
    %111 = math.exp %110 : vector<8x128xf32>
    %cst_48 = arith.constant dense<0.000000e+00> : vector<8xf32>
    %112 = vector.multi_reduction <add>, %111, %cst_48 [1] : vector<8x128xf32> to vector<8xf32>
    %113 = vector.shape_cast %112 : vector<8xf32> to vector<8x1xf32>
    %114 = tpu.reciprocal %113 : vector<8x1xf32> -> vector<8x1xf32>
    %115 = vector.broadcast %114 : vector<8x1xf32> to vector<8x128xf32>
    %116 = arith.mulf %111, %115 : vector<8x128xf32>
    %cst_49 = arith.constant -3.000000e+01 : f32
    %cst_50 = arith.constant 3.000000e+01 : f32
    %117 = vector.broadcast %cst_49 : f32 to vector<8x128xf32>
    %118 = arith.maximumf %117, %99 : vector<8x128xf32>
    %119 = vector.broadcast %cst_50 : f32 to vector<8x128xf32>
    %120 = arith.minimumf %119, %118 : vector<8x128xf32>
    %cst_51 = arith.constant 2.000000e+01 : f32
    %121 = vector.broadcast %cst_51 : f32 to vector<8x128xf32>
    %122 = arith.cmpf ogt, %99, %121 : vector<8x128xf32>
    %cst_52 = arith.constant 2.000000e+01 : f32
    %123 = vector.broadcast %cst_52 : f32 to vector<8x128xf32>
    %124 = arith.minimumf %99, %123 : vector<8x128xf32>
    %125 = math.exp %124 : vector<8x128xf32>
    %126 = math.log1p %125 : vector<8x128xf32>
    %127 = arith.select %122, %99, %126 : vector<8x128xi1>, vector<8x128xf32>
    %cst_53 = arith.constant 0.00999999977 : f32
    %cst_54 = arith.constant 1.000000e+02 : f32
    %128 = vector.broadcast %cst_53 : f32 to vector<8x128xf32>
    %129 = arith.maximumf %128, %127 : vector<8x128xf32>
    %130 = vector.broadcast %cst_54 : f32 to vector<8x128xf32>
    %131 = arith.minimumf %130, %129 : vector<8x128xf32>
    %132 = arith.select %104, %120, %131 : vector<8x128xi1>, vector<8x128xf32>
    %133 = arith.select %102, %116, %132 : vector<8x128xi1>, vector<8x128xf32>
    %c0_55 = arith.constant 0 : index
    %c0_56 = arith.constant 0 : index
    %134 = vector.load %arg8[%c0_55, %c0_56] : memref<8x128xf32, #tpu.memory_space<vmem>>, vector<8x128xf32>
    tpu.vector_store %arg8[%c0_55, %c0_56], %133 {strides = array<i32>} : memref<8x128xf32, #tpu.memory_space<vmem>>, vector<8x128xf32>,
    return
  }
}

</mosaic_0001>

<llo_original>
// kernel: cde_forward.1
$region0: #{cde_forward.1}
  #allocation0 [shape = 'u32[]', space=smem, size = 0x4, offset = 0x4, fixed_abs, tag = 'smem constant byte address 0x4 - core index']
  #allocation1 [shape = 'u32[144,128]{1,0:T(1,128)}', space=vmem, size = 0x12000, scoped, tag = 'internal scratch']
  %s0 = inlined_call_operand.vmem [shape: f32[8,4], index: 0, kind: input, shape index: {}]
  %s1 = inlined_call_operand.hbm [shape: f32[4,32], index: 1, kind: input, shape index: {}]
  %s2 = inlined_call_operand.hbm [shape: f32[32,32], index: 2, kind: input, shape index: {}]
  %s3 = inlined_call_operand.vmem [shape: f32[32,32], index: 3, kind: input, shape index: {}]
  %s4 = inlined_call_operand.hbm [shape: f32[8,32], index: 4, kind: input, shape index: {}]
  %s5 = inlined_call_operand.vmem [shape: f32[4], index: 5, kind: input, shape index: {}]
  %s6 = inlined_call_operand.hbm [shape: f32[64,128], index: 6, kind: input, shape index: {}]
  %s7 = inlined_call_operand.vmem [shape: f32[1,128], index: 7, kind: input, shape index: {}]
  %s8 = inlined_call_operand.vmem [shape: f32[8,128], index: 8, kind: output, shape index: {}]
  %s9 = sld [smem:[#allocation0]]
  $region62: #{cde_forward.1} parent=0
    _
  %s11 = ssub.s32 1, %s9
  %s12 = scalar_select 0, %s11, %s9
  $region1: #{cde_forward.1} parent=0
    #allocation2 [shape = 'u8[2048]{0}', space=vmem, size = 0x800, scoped, tag = 'input window, operand 1, single buffered']
    #allocation3 [shape = 's32[1]{0}', space=sflag, size = 0x4, scoped, tag = 'scoped memory for cde_forward.1']
    #allocation4 [shape = 's32[1]{0}', space=sflag, size = 0x4, scoped, tag = 'scoped memory for cde_forward.1']
    #allocation5 [shape = 'u8[16384]{0}', space=vmem, size = 0x4000, scoped, tag = 'input window, operand 2, single buffered']
    #allocation6 [shape = 's32[1]{0}', space=sflag, size = 0x4, scoped, tag = 'scoped memory for cde_forward.1']
    #allocation7 [shape = 'u8[4096]{0}', space=vmem, size = 0x1000, scoped, tag = 'input window, operand 4, single buffered']
    #allocation8 [shape = 'u8[512]{0}', space=smem, size = 0x200, scoped, tag = 'input window, operand 5, single buffered']
    #allocation9 [shape = 'u8[32768]{0}', space=vmem, size = 0x8000, scoped, tag = 'input window, operand 6, single buffered']
    #allocation10 [shape = 's32[1]{0}', space=sflag, size = 0x4, scoped, tag = 'scoped memory for cde_forward.1']
    %13 = vsyncpa [#allocation3], 0
    %14 = vsyncpa [#allocation6], 0
    %15 = vsyncpa [#allocation4], 0
    %16 = vsyncpa [#allocation10], 0
    // Predicated region
    $region2: #{cde_forward.1} parent=1 // pred_check
      _
    $region3: #{cde_forward.1} parent=1 // pred_check_branch
      %18 = sbr.rel (0) target = $region5
    $region4: #{cde_forward.1} parent=1 // pred_region
      _
    $region5: #{cde_forward.1} parent=1 // pred_fallthru
      _
    // Predicated region
    $region6: #{cde_forward.1} parent=1 // pred_check
      _
    $region7: #{cde_forward.1} parent=1 // pred_check_branch
      %20 = sbr.rel (0) target = $region9
    $region8: #{cde_forward.1} parent=1 // pred_region
      %s22 = ssub.s32 64, 64
      %23 = vsyncadd [#allocation3], %s22
      %s25 = sshll.u32 [#allocation2], 4
      %s26 = int_to_ptr.vmem [resolvable:$true] %s25
      %28 = dma.hbm_to_vmem [thread:$0]  %s1, 64, %s26, [#allocation3]
    $region9: #{cde_forward.1} parent=1 // pred_fallthru
      _
    // Predicated region
    $region10: #{cde_forward.1} parent=1 // pred_check
      _
    $region11: #{cde_forward.1} parent=1 // pred_check_branch
      %30 = sbr.rel (0) target = $region13
    $region12: #{cde_forward.1} parent=1 // pred_region
      %s32 = ssub.s32 512, 512
      %33 = vsyncadd [#allocation6], %s32
      %s34 = sshll.u32 [#allocation5], 4
      %s35 = int_to_ptr.vmem [resolvable:$true] %s34
      %40 = dma.hbm_to_vmem [thread:$0]  %s2, 512, %s35, [#allocation6], 128, 128, 8
    $region13: #{cde_forward.1} parent=1 // pred_fallthru
      _
    // Predicated region
    $region14: #{cde_forward.1} parent=1 // pred_check
      _
    $region15: #{cde_forward.1} parent=1 // pred_check_branch
      %42 = sbr.rel (0) target = $region17
    $region16: #{cde_forward.1} parent=1 // pred_region
      _
    $region17: #{cde_forward.1} parent=1 // pred_fallthru
      _
    // Predicated region
    $region18: #{cde_forward.1} parent=1 // pred_check
      _
    $region19: #{cde_forward.1} parent=1 // pred_check_branch
      %44 = sbr.rel (0) target = $region21
    $region20: #{cde_forward.1} parent=1 // pred_region
      %s46 = ssub.s32 128, 128
      %47 = vsyncadd [#allocation6], %s46
      %s49 = sshll.u32 [#allocation7], 4
      %s50 = int_to_ptr.vmem [resolvable:$true] %s49
      %52 = dma.hbm_to_vmem [thread:$0]  %s4, 128, %s50, [#allocation6]
    $region21: #{cde_forward.1} parent=1 // pred_fallthru
      _
    // Predicated region
    $region22: #{cde_forward.1} parent=1 // pred_check
      _
    $region23: #{cde_forward.1} parent=1 // pred_check_branch
      %54 = sbr.rel (0) target = $region25
    $region24: #{cde_forward.1} parent=1 // pred_region
      %s56 = ssub.s32 16, 16
      %57 = vsyncadd [#allocation4], %s56
      %s59 = sshll.u32 %s5, 4
      %s60 = int_to_ptr.vmem [resolvable:$true] %s59
      %62 = dma.vmem_to_smem %s60, 16, [#allocation8], [#allocation4]
    $region25: #{cde_forward.1} parent=1 // pred_fallthru
      _
    // Predicated region
    $region26: #{cde_forward.1} parent=1 // pred_check
      _
    $region27: #{cde_forward.1} parent=1 // pred_check_branch
      %64 = sbr.rel (0) target = $region29
    $region28: #{cde_forward.1} parent=1 // pred_region
      %s66 = ssub.s32 1024, 1024
      %67 = vsyncadd [#allocation10], %s66
      %s68 = sshll.u32 [#allocation9], 4
      %s69 = int_to_ptr.vmem [resolvable:$true] %s68
      %74 = dma.hbm_to_vmem [thread:$0]  %s6, 1024, %s69, [#allocation10], 128, 128, 8
    $region29: #{cde_forward.1} parent=1 // pred_fallthru
      _
    // Predicated region
    $region30: #{cde_forward.1} parent=1 // pred_check
      _
    $region31: #{cde_forward.1} parent=1 // pred_check_branch
      %76 = sbr.rel (0) target = $region33
    $region32: #{cde_forward.1} parent=1 // pred_region
      _
    $region33: #{cde_forward.1} parent=1 // pred_fallthru
      _
    // Predicated region
    $region34: #{cde_forward.1} parent=1 // pred_check
      _
    $region35: #{cde_forward.1} parent=1 // pred_check_branch
      %78 = sbr.rel (0) target = $region37
    $region36: #{cde_forward.1} parent=1 // pred_region
      %79 = dma.done [#allocation3], 64
    $region37: #{cde_forward.1} parent=1 // pred_fallthru
      _
    // Predicated region
    $region38: #{cde_forward.1} parent=1 // pred_check
      _
    $region39: #{cde_forward.1} parent=1 // pred_check_branch
      %81 = sbr.rel (0) target = $region41
    $region40: #{cde_forward.1} parent=1 // pred_region
      %82 = dma.done [#allocation6], 512
    $region41: #{cde_forward.1} parent=1 // pred_fallthru
      _
    // Predicated region
    $region42: #{cde_forward.1} parent=1 // pred_check
      _
    $region43: #{cde_forward.1} parent=1 // pred_check_branch
      %84 = sbr.rel (0) target = $region45
    $region44: #{cde_forward.1} parent=1 // pred_region
      %85 = dma.done [#allocation6], 128
    $region45: #{cde_forward.1} parent=1 // pred_fallthru
      _
    // Predicated region
    $region46: #{cde_forward.1} parent=1 // pred_check
      _
    $region47: #{cde_forward.1} parent=1 // pred_check_branch
      %87 = sbr.rel (0) target = $region49
    $region48: #{cde_forward.1} parent=1 // pred_region
      %88 = dma.done [#allocation4], 16
    $region49: #{cde_forward.1} parent=1 // pred_fallthru
      _
    // Predicated region
    $region50: #{cde_forward.1} parent=1 // pred_check
      _
    $region51: #{cde_forward.1} parent=1 // pred_check_branch
      %90 = sbr.rel (0) target = $region53
    $region52: #{cde_forward.1} parent=1 // pred_region
      %91 = dma.done [#allocation10], 1024
    $region53: #{cde_forward.1} parent=1 // pred_fallthru
      _
    %92 = sfence
    %v93 = vld [vmem:[%s0] sm:$0xff]
    %s94 = sld [smem:[#allocation8]]
    %s95 = sld [smem:[#allocation8 + $0x1]]
    %s96 = sld [smem:[#allocation8 + $0x2]]
    %v97 = vld [vmem:[#allocation2] sm:$0xf]
    %vm98 = vcmask 31744
    %v100 = vsel %vm98, %v93, 0
    %vm102 = vcmask 1043456
    %v104 = vsel %vm102, %v97, 0
    %106 = vmatprep.subr.mxu0 0.0
    %107 = vmatpush1.msra.mxu0 %v104
    %108 = vmatprep.subr.mxu0 0.0
    %109 = vmatpush1.msra.mxu0 0.0
    %110 = vmatprep.subr.mxu0 0.0
    %111 = vmatpush1.msra.mxu0 0.0
    %112 = vmatprep.subr.mxu0 0.0
    %113 = vmatpush1.msra.mxu0 0.0
    %114 = vmatprep.subr.mxu0 0.0
    %115 = vmatpush1.msra.mxu0 0.0
    %116 = vmatprep.subr.mxu0 0.0
    %117 = vmatpush1.msra.mxu0 0.0
    %118 = vmatprep.subr.mxu0 0.0
    %119 = vmatpush1.msra.mxu0 0.0
    %120 = vmatprep.subr.mxu0 0.0
    %121 = vmatpush1.msra.mxu0 0.0
    %122 = vmatprep.subr.mxu0 0.0
    %123 = vmatpush1.msra.mxu0 0.0
    %124 = vmatprep.subr.mxu0 0.0
    %125 = vmatpush1.msra.mxu0 0.0
    %126 = vmatprep.subr.mxu0 0.0
    %127 = vmatpush1.msra.mxu0 0.0
    %128 = vmatprep.subr.mxu0 0.0
    %129 = vmatpush1.msra.mxu0 0.0
    %130 = vmatprep.subr.mxu0 0.0
    %131 = vmatpush1.msra.mxu0 0.0
    %132 = vmatprep.subr.mxu0 0.0
    %133 = vmatpush1.msra.mxu0 0.0
    %134 = vmatprep.subr.mxu0 0.0
    %135 = vmatpush1.msra.mxu0 0.0
    %136 = vmatprep.subr.mxu0 0.0
    %137 = vmatpush1.msra.mxu0 0.0
    %138 = vmatprep.subr.mxu0 0.0
    %139 = vmatpush1.msra.mxu0 0.0
    %140 = vmatprep.subr.mxu0 0.0
    %141 = vmatpush1.msra.mxu0 0.0
    %142 = vmatprep.subr.mxu0 0.0
    %143 = vmatpush1.msra.mxu0 0.0
    %144 = vmatprep.subr.mxu0 0.0
    %145 = vmatpush1.msra.mxu0 0.0
    %146 = vmatprep.subr.mxu0 0.0
    %147 = vmatpush1.msra.mxu0 0.0
    %148 = vmatprep.subr.mxu0 0.0
    %149 = vmatpush1.msra.mxu0 0.0
    %150 = vmatprep.subr.mxu0 0.0
    %151 = vmatpush1.msra.mxu0 0.0
    %152 = vmatprep.subr.mxu0 0.0
    %153 = vmatpush1.msra.mxu0 0.0
    %154 = vmatprep.subr.mxu0 0.0
    %155 = vmatpush1.msra.mxu0 0.0
    %156 = vmatprep.subr.mxu0 0.0
    %157 = vmatpush1.msra.mxu0 0.0
    %158 = vmatprep.subr.mxu0 0.0
    %159 = vmatpush1.msra.mxu0 0.0
    %160 = vmatprep.subr.mxu0 0.0
    %161 = vmatpush1.msra.mxu0 0.0
    %162 = vmatprep.subr.mxu0 0.0
    %163 = vmatpush1.msra.mxu0 0.0
    %164 = vmatprep.subr.mxu0 0.0
    %165 = vmatpush1.msra.mxu0 0.0
    %166 = vmatprep.subr.mxu0 0.0
    %167 = vmatpush1.msra.mxu0 0.0
    %168 = vmatprep.subr.mxu0 0.0
    %169 = vmatpush1.msra.mxu0 0.0
    %170 = vmatprep.mubr.f32.mxu0 0.0
    %171 = vmatmul.mubr.f32.gmra.mrb[0].mxu0 %v100
    %v172 = vpop.f32.mrb[0].mxu0
    %v173 = vadd.f32 0.0, %v172
    %v174 = vpop.f32.mrb[0].mxu0
    %175 = vdwg.mxu0
    %v176 = vld [vmem:[#allocation7] sm:$0x1]
    %v177 = vld [vmem:[#allocation7 + $0x1] sm:$0x1]
    %vm178 = vcmask 261120
    %v179 = vsel %vm178, %v173, 0.0
    %v180 = vrot.slane %v179, 4
    %v181 = vadd.f32 %v179, %v180
    %v182 = vrot.slane %v181, 2
    %v183 = vadd.f32 %v181, %v182
    %v184 = vrot.slane %v183, 1
    %v185 = vadd.f32 %v183, %v184
    %v186 = vrcp.pop 8.0
    %v187 = vmul.f32 %v185, %v186
    %v188 = vsub.f32 %v173, %v187
    %v189 = vmul.f32 %v188, %v188
    %v190 = vsel %vm178, %v189, 0.0
    %v191 = vrot.slane %v190, 4
    %v192 = vadd.f32 %v190, %v191
    %v193 = vrot.slane %v192, 2
    %v194 = vadd.f32 %v192, %v193
    %v195 = vrot.slane %v194, 1
    %v196 = vadd.f32 %v194, %v195
    %v197 = vmul.f32 %v196, %v186
    %v198 = vadd.f32 %v197, 1e-05
    %v199 = vrsqrt.pop %v198
    %v200 = vmul.f32 %v176, %v199
    %v201 = vlaneseq
    %v202 = vshrl.u32 %v201, 7
    %v203 = vsub.s32 0, %v202
    %v204 = vrot.slane %v200, %v203
    %v205 = vmul.f32 %v188, %v204
    %v206 = vlaneseq
    %v207 = vshrl.u32 %v206, 7
    %v208 = vsub.s32 0, %v207
    %v209 = vrot.slane %v177, %v208
    %v210 = vadd.f32 %v205, %v209
    %vm211 = vcmp.ge.f32.partialorder %v210, 0.0
    %v212 = vstv %s94
    %v213 = vmul.f32 %v212, %v210
    %v214 = vsel %vm211, %v210, %v213
    %v215 = vld [vmem:[#allocation5] sm:$0xff]
    %v216 = vld [vmem:[#allocation5 + $0x8] sm:$0xff]
    %v217 = vld [vmem:[#allocation5 + $0x10] sm:$0xff]
    %v218 = vld [vmem:[#allocation5 + $0x18] sm:$0xff]
    %v220 = vsel %vm178, %v214, 0
    %222 = vmatprep.subr.mxu0 0.0
    %223 = vmatpush1.msra.mxu0 %v215
    %224 = vmatprep.subr.mxu0 0.0
    %225 = vmatpush1.msra.mxu0 %v216
    %226 = vmatprep.subr.mxu0 0.0
    %227 = vmatpush1.msra.mxu0 %v217
    %228 = vmatprep.subr.mxu0 0.0
    %229 = vmatpush1.msra.mxu0 %v218
    %230 = vmatprep.subr.mxu0 0.0
    %231 = vmatpush1.msra.mxu0 0.0
    %232 = vmatprep.subr.mxu0 0.0
    %233 = vmatpush1.msra.mxu0 0.0
    %234 = vmatprep.subr.mxu0 0.0
    %235 = vmatpush1.msra.mxu0 0.0
    %236 = vmatprep.subr.mxu0 0.0
    %237 = vmatpush1.msra.mxu0 0.0
    %238 = vmatprep.subr.mxu0 0.0
    %239 = vmatpush1.msra.mxu0 0.0
    %240 = vmatprep.subr.mxu0 0.0
    %241 = vmatpush1.msra.mxu0 0.0
    %242 = vmatprep.subr.mxu0 0.0
    %243 = vmatpush1.msra.mxu0 0.0
    %244 = vmatprep.subr.mxu0 0.0
    %245 = vmatpush1.msra.mxu0 0.0
    %246 = vmatprep.subr.mxu0 0.0
    %247 = vmatpush1.msra.mxu0 0.0
    %248 = vmatprep.subr.mxu0 0.0
    %249 = vmatpush1.msra.mxu0 0.0
    %250 = vmatprep.subr.mxu0 0.0
    %251 = vmatpush1.msra.mxu0 0.0
    %252 = vmatprep.subr.mxu0 0.0
    %253 = vmatpush1.msra.mxu0 0.0
    %254 = vmatprep.subr.mxu0 0.0
    %255 = vmatpush1.msra.mxu0 0.0
    %256 = vmatprep.subr.mxu0 0.0
    %257 = vmatpush1.msra.mxu0 0.0
    %258 = vmatprep.subr.mxu0 0.0
    %259 = vmatpush1.msra.mxu0 0.0
    %260 = vmatprep.subr.mxu0 0.0
    %261 = vmatpush1.msra.mxu0 0.0
    %262 = vmatprep.subr.mxu0 0.0
    %263 = vmatpush1.msra.mxu0 0.0
    %264 = vmatprep.subr.mxu0 0.0
    %265 = vmatpush1.msra.mxu0 0.0
    %266 = vmatprep.subr.mxu0 0.0
    %267 = vmatpush1.msra.mxu0 0.0
    %268 = vmatprep.subr.mxu0 0.0
    %269 = vmatpush1.msra.mxu0 0.0
    %270 = vmatprep.subr.mxu0 0.0
    %271 = vmatpush1.msra.mxu0 0.0
    %272 = vmatprep.subr.mxu0 0.0
    %273 = vmatpush1.msra.mxu0 0.0
    %274 = vmatprep.subr.mxu0 0.0
    %275 = vmatpush1.msra.mxu0 0.0
    %276 = vmatprep.subr.mxu0 0.0
    %277 = vmatpush1.msra.mxu0 0.0
    %278 = vmatprep.subr.mxu0 0.0
    %279 = vmatpush1.msra.mxu0 0.0
    %280 = vmatprep.subr.mxu0 0.0
    %281 = vmatpush1.msra.mxu0 0.0
    %282 = vmatprep.subr.mxu0 0.0
    %283 = vmatpush1.msra.mxu0 0.0
    %284 = vmatprep.subr.mxu0 0.0
    %285 = vmatpush1.msra.mxu0 0.0
    %286 = vmatprep.mubr.f32.mxu0 0.0
    %287 = vmatmul.mubr.f32.gmra.mrb[0].mxu0 %v220
    %v288 = vpop.f32.mrb[0].mxu0
    %v289 = vadd.f32 0.0, %v288
    %v290 = vpop.f32.mrb[0].mxu0
    %291 = vdwg.mxu0
    %v292 = vld [vmem:[#allocation7 + $0x2] sm:$0x1]
    %v293 = vld [vmem:[#allocation7 + $0x3] sm:$0x1]
    %v294 = vsel %vm178, %v289, 0.0
    %v295 = vrot.slane %v294, 4
    %v296 = vadd.f32 %v294, %v295
    %v297 = vrot.slane %v296, 2
    %v298 = vadd.f32 %v296, %v297
    %v299 = vrot.slane %v298, 1
    %v300 = vadd.f32 %v298, %v299
    %v301 = vmul.f32 %v300, %v186
    %v302 = vsub.f32 %v289, %v301
    %v303 = vmul.f32 %v302, %v302
    %v304 = vsel %vm178, %v303, 0.0
    %v305 = vrot.slane %v304, 4
    %v306 = vadd.f32 %v304, %v305
    %v307 = vrot.slane %v306, 2
    %v308 = vadd.f32 %v306, %v307
    %v309 = vrot.slane %v308, 1
    %v310 = vadd.f32 %v308, %v309
    %v311 = vmul.f32 %v310, %v186
    %v312 = vadd.f32 %v311, 1e-05
    %v313 = vrsqrt.pop %v312
    %v314 = vmul.f32 %v292, %v313
    %v315 = vlaneseq
    %v316 = vshrl.u32 %v315, 7
    %v317 = vsub.s32 0, %v316
    %v318 = vrot.slane %v314, %v317
    %v319 = vmul.f32 %v302, %v318
    %v320 = vlaneseq
    %v321 = vshrl.u32 %v320, 7
    %v322 = vsub.s32 0, %v321
    %v323 = vrot.slane %v293, %v322
    %v324 = vadd.f32 %v319, %v323
    %vm325 = vcmp.ge.f32.partialorder %v324, 0.0
    %v326 = vstv %s95
    %v327 = vmul.f32 %v326, %v324
    %v328 = vsel %vm325, %v324, %v327
    %v329 = vld [vmem:[%s3] sm:$0xff]
    %v330 = vld [vmem:[%s3 + $0x8] sm:$0xff]
    %v331 = vld [vmem:[%s3 + $0x10] sm:$0xff]
    %v332 = vld [vmem:[%s3 + $0x18] sm:$0xff]
    %v334 = vsel %vm178, %v328, 0
    %336 = vmatprep.subr.mxu0 0.0
    %337 = vmatpush1.msra.mxu0 %v329
    %338 = vmatprep.subr.mxu0 0.0
    %339 = vmatpush1.msra.mxu0 %v330
    %340 = vmatprep.subr.mxu0 0.0
    %341 = vmatpush1.msra.mxu0 %v331
    %342 = vmatprep.subr.mxu0 0.0
    %343 = vmatpush1.msra.mxu0 %v332
    %344 = vmatprep.subr.mxu0 0.0
    %345 = vmatpush1.msra.mxu0 0.0
    %346 = vmatprep.subr.mxu0 0.0
    %347 = vmatpush1.msra.mxu0 0.0
    %348 = vmatprep.subr.mxu0 0.0
    %349 = vmatpush1.msra.mxu0 0.0
    %350 = vmatprep.subr.mxu0 0.0
    %351 = vmatpush1.msra.mxu0 0.0
    %352 = vmatprep.subr.mxu0 0.0
    %353 = vmatpush1.msra.mxu0 0.0
    %354 = vmatprep.subr.mxu0 0.0
    %355 = vmatpush1.msra.mxu0 0.0
    %356 = vmatprep.subr.mxu0 0.0
    %357 = vmatpush1.msra.mxu0 0.0
    %358 = vmatprep.subr.mxu0 0.0
    %359 = vmatpush1.msra.mxu0 0.0
    %360 = vmatprep.subr.mxu0 0.0
    %361 = vmatpush1.msra.mxu0 0.0
    %362 = vmatprep.subr.mxu0 0.0
    %363 = vmatpush1.msra.mxu0 0.0
    %364 = vmatprep.subr.mxu0 0.0
    %365 = vmatpush1.msra.mxu0 0.0
    %366 = vmatprep.subr.mxu0 0.0
    %367 = vmatpush1.msra.mxu0 0.0
    %368 = vmatprep.subr.mxu0 0.0
    %369 = vmatpush1.msra.mxu0 0.0
    %370 = vmatprep.subr.mxu0 0.0
    %371 = vmatpush1.msra.mxu0 0.0
    %372 = vmatprep.subr.mxu0 0.0
    %373 = vmatpush1.msra.mxu0 0.0
    %374 = vmatprep.subr.mxu0 0.0
    %375 = vmatpush1.msra.mxu0 0.0
    %376 = vmatprep.subr.mxu0 0.0
    %377 = vmatpush1.msra.mxu0 0.0
    %378 = vmatprep.subr.mxu0 0.0
    %379 = vmatpush1.msra.mxu0 0.0
    %380 = vmatprep.subr.mxu0 0.0
    %381 = vmatpush1.msra.mxu0 0.0
    %382 = vmatprep.subr.mxu0 0.0
    %383 = vmatpush1.msra.mxu0 0.0
    %384 = vmatprep.subr.mxu0 0.0
    %385 = vmatpush1.msra.mxu0 0.0
    %386 = vmatprep.subr.mxu0 0.0
    %387 = vmatpush1.msra.mxu0 0.0
    %388 = vmatprep.subr.mxu0 0.0
    %389 = vmatpush1.msra.mxu0 0.0
    %390 = vmatprep.subr.mxu0 0.0
    %391 = vmatpush1.msra.mxu0 0.0
    %392 = vmatprep.subr.mxu0 0.0
    %393 = vmatpush1.msra.mxu0 0.0
    %394 = vmatprep.subr.mxu0 0.0
    %395 = vmatpush1.msra.mxu0 0.0
    %396 = vmatprep.subr.mxu0 0.0
    %397 = vmatpush1.msra.mxu0 0.0
    %398 = vmatprep.subr.mxu0 0.0
    %399 = vmatpush1.msra.mxu0 0.0
    %400 = vmatprep.mubr.f32.mxu0 0.0
    %401 = vmatmul.mubr.f32.gmra.mrb[0].mxu0 %v334
    %v402 = vpop.f32.mrb[0].mxu0
    %v403 = vadd.f32 0.0, %v402
    %v404 = vpop.f32.mrb[0].mxu0
    %405 = vdwg.mxu0
    %v406 = vld [vmem:[#allocation7 + $0x4] sm:$0x1]
    %v407 = vld [vmem:[#allocation7 + $0x5] sm:$0x1]
    %v408 = vsel %vm178, %v403, 0.0
    %v409 = vrot.slane %v408, 4
    %v410 = vadd.f32 %v408, %v409
    %v411 = vrot.slane %v410, 2
    %v412 = vadd.f32 %v410, %v411
    %v413 = vrot.slane %v412, 1
    %v414 = vadd.f32 %v412, %v413
    %v415 = vmul.f32 %v414, %v186
    %v416 = vsub.f32 %v403, %v415
    %v417 = vmul.f32 %v416, %v416
    %v418 = vsel %vm178, %v417, 0.0
    %v419 = vrot.slane %v418, 4
    %v420 = vadd.f32 %v418, %v419
    %v421 = vrot.slane %v420, 2
    %v422 = vadd.f32 %v420, %v421
    %v423 = vrot.slane %v422, 1
    %v424 = vadd.f32 %v422, %v423
    %v425 = vmul.f32 %v424, %v186
    %v426 = vadd.f32 %v425, 1e-05
    %v427 = vrsqrt.pop %v426
    %v428 = vmul.f32 %v406, %v427
    %v429 = vlaneseq
    %v430 = vshrl.u32 %v429, 7
    %v431 = vsub.s32 0, %v430
    %v432 = vrot.slane %v428, %v431
    %v433 = vmul.f32 %v416, %v432
    %v434 = vlaneseq
    %v435 = vshrl.u32 %v434, 7
    %v436 = vsub.s32 0, %v435
    %v437 = vrot.slane %v407, %v436
    %v438 = vadd.f32 %v433, %v437
    %vm439 = vcmp.ge.f32.partialorder %v438, 0.0
    %v440 = vstv %s96
    %v441 = vmul.f32 %v440, %v438
    %v442 = vsel %vm439, %v438, %v441
    %v443 = vmax.f32 %v442, -1000.0
    %v444 = vmin.f32 %v443, 1000.0
    %v445 = vld [vmem:[#allocation9] sm:$0xff]
    %v446 = vld [vmem:[#allocation9 + $0x8] sm:$0xff]
    %v447 = vld [vmem:[#allocation9 + $0x10] sm:$0xff]
    %v448 = vld [vmem:[#allocation9 + $0x18] sm:$0xff]
    %v449 = vld [vmem:[#allocation9 + $0x20] sm:$0xff]
    %v450 = vld [vmem:[#allocation9 + $0x28] sm:$0xff]
    %v451 = vld [vmem:[#allocation9 + $0x30] sm:$0xff]
    %v452 = vld [vmem:[#allocation9 + $0x38] sm:$0xff]
    %v454 = vsel %vm178, %v442, 0
    %456 = vmatprep.subr.mxu0 0.0
    %457 = vmatpush1.msra.mxu0 %v449
    %458 = vmatprep.subr.mxu0 0.0
    %459 = vmatpush1.msra.mxu0 %v450
    %460 = vmatprep.subr.mxu0 0.0
    %461 = vmatpush1.msra.mxu0 %v451
    %462 = vmatprep.subr.mxu0 0.0
    %463 = vmatpush1.msra.mxu0 %v452
    %464 = vmatprep.subr.mxu0 0.0
    %465 = vmatpush1.msra.mxu0 0.0
    %466 = vmatprep.subr.mxu0 0.0
    %467 = vmatpush1.msra.mxu0 0.0
    %468 = vmatprep.subr.mxu0 0.0
    %469 = vmatpush1.msra.mxu0 0.0
    %470 = vmatprep.subr.mxu0 0.0
    %471 = vmatpush1.msra.mxu0 0.0
    %472 = vmatprep.subr.mxu0 0.0
    %473 = vmatpush1.msra.mxu0 0.0
    %474 = vmatprep.subr.mxu0 0.0
    %475 = vmatpush1.msra.mxu0 0.0
    %476 = vmatprep.subr.mxu0 0.0
    %477 = vmatpush1.msra.mxu0 0.0
    %478 = vmatprep.subr.mxu0 0.0
    %479 = vmatpush1.msra.mxu0 0.0
    %480 = vmatprep.subr.mxu0 0.0
    %481 = vmatpush1.msra.mxu0 0.0
    %482 = vmatprep.subr.mxu0 0.0
    %483 = vmatpush1.msra.mxu0 0.0
    %484 = vmatprep.subr.mxu0 0.0
    %485 = vmatpush1.msra.mxu0 0.0
    %486 = vmatprep.subr.mxu0 0.0
    %487 = vmatpush1.msra.mxu0 0.0
    %488 = vmatprep.subr.mxu0 0.0
    %489 = vmatpush1.msra.mxu0 0.0
    %490 = vmatprep.subr.mxu0 0.0
    %491 = vmatpush1.msra.mxu0 0.0
    %492 = vmatprep.subr.mxu0 0.0
    %493 = vmatpush1.msra.mxu0 0.0
    %494 = vmatprep.subr.mxu0 0.0
    %495 = vmatpush1.msra.mxu0 0.0
    %496 = vmatprep.subr.mxu0 0.0
    %497 = vmatpush1.msra.mxu0 0.0
    %498 = vmatprep.subr.mxu0 0.0
    %499 = vmatpush1.msra.mxu0 0.0
    %500 = vmatprep.subr.mxu0 0.0
    %501 = vmatpush1.msra.mxu0 0.0
    %502 = vmatprep.subr.mxu0 0.0
    %503 = vmatpush1.msra.mxu0 0.0
    %504 = vmatprep.subr.mxu0 0.0
    %505 = vmatpush1.msra.mxu0 0.0
    %506 = vmatprep.subr.mxu0 0.0
    %507 = vmatpush1.msra.mxu0 0.0
    %508 = vmatprep.subr.mxu0 0.0
    %509 = vmatpush1.msra.mxu0 0.0
    %510 = vmatprep.subr.mxu0 0.0
    %511 = vmatpush1.msra.mxu0 0.0
    %512 = vmatprep.subr.mxu0 0.0
    %513 = vmatpush1.msra.mxu0 0.0
    %514 = vmatprep.subr.mxu0 0.0
    %515 = vmatpush1.msra.mxu0 0.0
    %516 = vmatprep.subr.mxu0 0.0
    %517 = vmatpush1.msra.mxu0 0.0
    %518 = vmatprep.subr.mxu0 0.0
    %519 = vmatpush1.msra.mxu0 0.0
    %520 = vmatprep.mubr.f32.mxu0 0.0
    %521 = vmatmul.mubr.f32.gmra.mrb[0].mxu0 %v454
    %v522 = vpop.f32.mrb[0].mxu0
    %v523 = vadd.f32 0.0, %v522
    %v524 = vpop.f32.mrb[0].mxu0
    %525 = vdwg.mxu0
    %v527 = vsel %vm178, %v444, 0
    %529 = vmatprep.subr.mxu0 0.0
    %530 = vmatpush1.msra.mxu0 %v445
    %531 = vmatprep.subr.mxu0 0.0
    %532 = vmatpush1.msra.mxu0 %v446
    %533 = vmatprep.subr.mxu0 0.0
    %534 = vmatpush1.msra.mxu0 %v447
    %535 = vmatprep.subr.mxu0 0.0
    %536 = vmatpush1.msra.mxu0 %v448
    %537 = vmatprep.subr.mxu0 0.0
    %538 = vmatpush1.msra.mxu0 0.0
    %539 = vmatprep.subr.mxu0 0.0
    %540 = vmatpush1.msra.mxu0 0.0
    %541 = vmatprep.subr.mxu0 0.0
    %542 = vmatpush1.msra.mxu0 0.0
    %543 = vmatprep.subr.mxu0 0.0
    %544 = vmatpush1.msra.mxu0 0.0
    %545 = vmatprep.subr.mxu0 0.0
    %546 = vmatpush1.msra.mxu0 0.0
    %547 = vmatprep.subr.mxu0 0.0
    %548 = vmatpush1.msra.mxu0 0.0
    %549 = vmatprep.subr.mxu0 0.0
    %550 = vmatpush1.msra.mxu0 0.0
    %551 = vmatprep.subr.mxu0 0.0
    %552 = vmatpush1.msra.mxu0 0.0
    %553 = vmatprep.subr.mxu0 0.0
    %554 = vmatpush1.msra.mxu0 0.0
    %555 = vmatprep.subr.mxu0 0.0
    %556 = vmatpush1.msra.mxu0 0.0
    %557 = vmatprep.subr.mxu0 0.0
    %558 = vmatpush1.msra.mxu0 0.0
    %559 = vmatprep.subr.mxu0 0.0
    %560 = vmatpush1.msra.mxu0 0.0
    %561 = vmatprep.subr.mxu0 0.0
    %562 = vmatpush1.msra.mxu0 0.0
    %563 = vmatprep.subr.mxu0 0.0
    %564 = vmatpush1.msra.mxu0 0.0
    %565 = vmatprep.subr.mxu0 0.0
    %566 = vmatpush1.msra.mxu0 0.0
    %567 = vmatprep.subr.mxu0 0.0
    %568 = vmatpush1.msra.mxu0 0.0
    %569 = vmatprep.subr.mxu0 0.0
    %570 = vmatpush1.msra.mxu0 0.0
    %571 = vmatprep.subr.mxu0 0.0
    %572 = vmatpush1.msra.mxu0 0.0
    %573 = vmatprep.subr.mxu0 0.0
    %574 = vmatpush1.msra.mxu0 0.0
    %575 = vmatprep.subr.mxu0 0.0
    %576 = vmatpush1.msra.mxu0 0.0
    %577 = vmatprep.subr.mxu0 0.0
    %578 = vmatpush1.msra.mxu0 0.0
    %579 = vmatprep.subr.mxu0 0.0
    %580 = vmatpush1.msra.mxu0 0.0
    %581 = vmatprep.subr.mxu0 0.0
    %582 = vmatpush1.msra.mxu0 0.0
    %583 = vmatprep.subr.mxu0 0.0
    %584 = vmatpush1.msra.mxu0 0.0
    %585 = vmatprep.subr.mxu0 0.0
    %586 = vmatpush1.msra.mxu0 0.0
    %587 = vmatprep.subr.mxu0 0.0
    %588 = vmatpush1.msra.mxu0 0.0
    %589 = vmatprep.subr.mxu0 0.0
    %590 = vmatpush1.msra.mxu0 0.0
    %591 = vmatprep.subr.mxu0 0.0
    %592 = vmatpush1.msra.mxu0 0.0
    %593 = vmatprep.mubr.f32.mxu0 0.0
    %594 = vmatmul.mubr.f32.gmra.mrb[0].mxu0 %v527
    %v595 = vpop.f32.mrb[0].mxu0
    %v596 = vadd.f32 %v523, %v595
    %v597 = vpop.f32.mrb[0].mxu0
    %598 = vdwg.mxu0
    %v599 = vld [vmem:[%s7] sm:$0x1]
    %v601 = vlaneseq
    %v602 = vshrl.u32 %v601, 7
    %v603 = vsub.s32 0, %v602
    %v604 = vrot.slane %v599, %v603
    %v606 = vadd.f32 %v596, %v604
    %v607 = vlaneseq
    %v608 = vand.u32 %v607, 127
    %vm609 = vcmp.lt.s32.totalorder %v608, 5
    %vm610 = vcmp.lt.s32.totalorder %v608, 10
    %v611 = vsel %vm609, %v606, -1e+30
    %612 = vmax.xlane.f32.xlu0 %v611
    %v613 = vpop.xlane.xlu0 %612
    %v614 = vsub.f32 %v611, %v613
    %v615 = vmul.f32 %v614, 1.442695
    %v616 = vpow.pop %v615
    %617 = vadd.xlane.f32.xlu0 %v616
    %v618 = vpop.xlane.xlu0 %617
    %v619 = vrcp.pop %v618
    %v620 = vmul.f32 %v616, %v619
    %v621 = vmax.f32 %v606, -30.0
    %v622 = vmin.f32 %v621, 30.0
    %vm623 = vcmp.gt.f32.partialorder %v606, 20.0
    %v624 = vmin.f32 %v606, 20.0
    %v625 = vmul.f32 %v624, 1.442695
    %v626 = vpow.pop %v625
    %v627 = vadd.f32 %v626, 1.0
    %v628 = vlog2.pop %v627
    %v629 = vmul.f32 %v628, 0.6931472
    %v630 = vmul.f32 -0.5, %v626
    %v631 = vadd.f32 %v630, 1.0
    %v632 = vmul.f32 %v631, %v626
    %v633 = vand.u32 2147483647, %v626
    %vm634 = vcmp.lt.f32.partialorder %v633, 0.0004427343
    %v635 = vsel %vm634, %v632, %v629
    %v636 = vsel %vm623, %v606, %v635
    %v637 = vmax.f32 %v636, 0.01
    %v638 = vmin.f32 %v637, 100.0
    %v639 = vsel %vm610, %v622, %v638
    %v640 = vsel %vm609, %v620, %v639
    %641 = vst [vmem:[%s8] sm:$0xff] %v640
    // Predicated region
    $region54: #{cde_forward.1} parent=1 // pred_check
      _
    $region55: #{cde_forward.1} parent=1 // pred_check_branch
      %643 = sbr.rel (0) target = $region57
    $region56: #{cde_forward.1} parent=1 // pred_region
      _
    $region57: #{cde_forward.1} parent=1 // pred_fallthru
      _
    // Predicated region
    $region58: #{cde_forward.1} parent=1 // pred_check
      _
    $region59: #{cde_forward.1} parent=1 // pred_check_branch
      %645 = sbr.rel (0) target = $region61
    $region60: #{cde_forward.1} parent=1 // pred_region
      _
    $region61: #{cde_forward.1} parent=1 // pred_fallthru
      _
    %646 = vsyncpa [#allocation3], 1
    %647 = vsyncpa [#allocation6], 1
    %648 = vsyncpa [#allocation10], 1
    %649 = vsyncpa [#allocation4], 1

</llo_original>
